<compile_context>
chip_gen: v7x
topology: tpu7x:2x2x1
jax: 0.10.0
libtpu: 0.0.40
codegen_flags: <defaults>
</compile_context>

<pallas_src>
import jax
import jax.numpy as jnp
from jax import lax
from jax.experimental import pallas as pl
from jax.experimental.pallas import tpu as pltpu


def disparity_regression_kernel(x_ref, o_ref):
    """Weighted sum over the disparity axis for one (batch, H-tile) block.

    x_ref: (D, TH, W)  probability / cost volume tile
    o_ref: (TH, W)     expected disparity map tile
    """
    d_max = x_ref.shape[0]

    def body(d, acc):
        # x_ref[d] is a clean (TH, W) slice; accumulate in f32.
        w = lax.convert_element_type(d, jnp.float32)
        return acc + x_ref[d].astype(jnp.float32) * w

    acc = lax.fori_loop(0, d_max, body, jnp.zeros(o_ref.shape, jnp.float32))
    o_ref[...] = acc.astype(o_ref.dtype)


def _choose_h_tile(H, D, W, itemsize, target_block_bytes):
    """Pick an H tile that is a multiple of 8 (or the full H) and divides H."""
    bytes_per_row = max(1, D * W * itemsize)
    th = max(1, target_block_bytes // bytes_per_row)
    if H % 8 == 0:
        th = min(H, max(8, (th // 8) * 8))
        # Prefer a tile that evenly divides H (keeps edge blocks full).
        while H % th != 0:
            th -= 8
        return th
    # Ragged H: fall back to the full dimension (always satisfies tiling rules).
    return H


def disparity_regression(x: jax.Array, maxdisp: int,
                         *, target_block_bytes: int = 4 << 20) -> jax.Array:
    """JAX wrapper around the Pallas kernel.

    x: (B, D, H, W) with D == maxdisp.  Returns (B, H, W) in x.dtype.
    """
    B, D, H, W = x.shape
    assert D == maxdisp, f"channel dim {D} must equal maxdisp {maxdisp}"

    itemsize = jnp.dtype(x.dtype).itemsize
    th = _choose_h_tile(H, D, W, itemsize, target_block_bytes)
    grid = (B, H // th)

    cost = pl.CostEstimate(
        flops=2 * B * D * H * W,
        bytes_accessed=(B * D * H * W + B * H * W) * itemsize,
        transcendentals=0,
    )

    return pl.pallas_call(
        disparity_regression_kernel,
        out_shape=jax.ShapeDtypeStruct((B, H, W), x.dtype),
        grid=grid,
        in_specs=[
            # One (D, TH, W) tile per grid step; batch dim squeezed, D kept
            # fully inside the block so the reduction needs no accumulator.
            pl.BlockSpec((None, D, th, W), lambda b, h: (b, 0, h, 0)),
        ],
        out_specs=pl.BlockSpec((None, th, W), lambda b, h: (b, h, 0)),
        compiler_params=pltpu.CompilerParams(
            dimension_semantics=("parallel", "parallel"),
        ),
        cost_estimate=cost,
    )(x)


if __name__ == "__main__":
    # Small shapes consistent with the module's forward: (B, maxdisp, H, W)
    B, maxdisp, H, W = 2, 4, 16, 16

    key = jax.random.PRNGKey(0)
    logits = jax.random.normal(key, (B, maxdisp, H, W), dtype=jnp.float32)
    # A probability volume over disparities (as PSMNet feeds softmax output),
    # though the kernel works for arbitrary x.
    x = jax.nn.softmax(logits, axis=1)

    out = disparity_regression(x, maxdisp)
    out = jax.block_until_ready(out)

    # Pure-JAX reference matching the PyTorch forward exactly.
    disp_ref = jnp.arange(maxdisp, dtype=x.dtype).reshape(1, maxdisp, 1, 1)
    ref = jnp.sum(x * disp_ref, axis=1)

    assert out.shape == (B, H, W), out.shape
    assert out.dtype == x.dtype, out.dtype
    assert jnp.allclose(out, ref, atol=1e-5, rtol=1e-5), "mismatch vs reference"

    print("KERNEL_OK")
</pallas_src>

<mosaic_0001>
module attributes {stable_mosaic.version = 11 : i64} {
  func.func @disparity_regression_kernel(%arg0: i32, %arg1: i32, %arg2: memref<1x4x16x16xf32, #tpu.memory_space<vmem>>, %arg3: memref<1x16x16xf32, #tpu.memory_space<vmem>>) attributes {dimension_semantics = [#tpu.dimension_semantics<parallel>, #tpu.dimension_semantics<parallel>], iteration_bounds = array<i64: 2, 1>, scalar_prefetch = 0 : i64, scratch_operands = 0 : i64, tpu.core_type = #tpu.core_type<tc>, window_params = [{transform_indices = @transform_0, window_bounds = array<i64: 1, 4, 16, 16>}, {transform_indices = @transform_1, window_bounds = array<i64: 1, 16, 16>}]} {
    %cst = arith.constant 0.000000e+00 : f32
    %0 = vector.broadcast %cst : f32 to vector<16x16xf32>
    %c0_i32 = arith.constant 0 : i32
    %c4_i32 = arith.constant 4 : i32
    %1 = arith.addi %c0_i32, %c4_i32 : i32
    %c1_i32 = arith.constant 1 : i32
    %2 = scf.for %arg4 = %c0_i32 to %1 step %c1_i32 iter_args(%arg5 = %0) -> (vector<16x16xf32>)  : i32 {
      %6 = arith.sitofp %arg4 : i32 to f32
      %c0_3 = arith.constant 0 : index
      %7 = arith.index_cast %arg4 : i32 to index
      %c0_4 = arith.constant 0 : index
      %c0_5 = arith.constant 0 : index
      %8 = vector.load %arg2[%c0_3, %7, %c0_4, %c0_5] : memref<1x4x16x16xf32, #tpu.memory_space<vmem>>, vector<1x1x16x16xf32>
      %9 = vector.shape_cast %8 : vector<1x1x16x16xf32> to vector<16x16xf32>
      %10 = vector.broadcast %6 : f32 to vector<16x16xf32>
      %11 = arith.mulf %9, %10 : vector<16x16xf32>
      %12 = arith.addf %arg5, %11 : vector<16x16xf32>
      scf.yield %12 : vector<16x16xf32>
    }
    %c4_i32_0 = arith.constant 4 : i32
    %c0 = arith.constant 0 : index
    %c0_1 = arith.constant 0 : index
    %c0_2 = arith.constant 0 : index
    %3 = vector.load %arg3[%c0, %c0_1, %c0_2] : memref<1x16x16xf32, #tpu.memory_space<vmem>>, vector<1x16x16xf32>
    %4 = vector.shape_cast %3 : vector<1x16x16xf32> to vector<16x16xf32>
    %5 = vector.shape_cast %2 : vector<16x16xf32> to vector<1x16x16xf32>
    tpu.vector_store %arg3[%c0, %c0_1, %c0_2], %5 {strides = array<i32>} : memref<1x16x16xf32, #tpu.memory_space<vmem>>, vector<1x16x16xf32>,
    return
  }
  func.func @transform_0(%arg0: i32, %arg1: i32) -> (i32, i32, i32, i32) {
    %c0_i32 = arith.constant 0 : i32
    %c0_i32_0 = arith.constant 0 : i32
    %c0_i32_1 = arith.constant 0 : i32
    return %arg0, %c0_i32, %arg1, %c0_i32_0 : i32, i32, i32, i32
  }
  func.func @transform_1(%arg0: i32, %arg1: i32) -> (i32, i32, i32) {
    %c0_i32 = arith.constant 0 : i32
    %c0_i32_0 = arith.constant 0 : i32
    return %arg0, %arg1, %c0_i32 : i32, i32, i32
  }
}

</mosaic_0001>

<llo_original>
// kernel: tpu_custom_call.1
$region0: #{tpu_custom_call.1}
  #allocation0 [shape = 'u32[]', space=smem, size = 0x4, offset = 0x4, fixed_abs, tag = 'smem constant byte address 0x4 - core index']
  #allocation1 [shape = 'u32[144,128]{1,0:T(1,128)}', space=vmem, size = 0x12000, scoped, tag = 'internal scratch']
  %s0 = inlined_call_operand.hbm [shape: f32[2,4,16,16], index: 0, kind: input, shape index: {}]
  %s1 = inlined_call_operand.hbm [shape: f32[2,16,16], index: 1, kind: output, shape index: {}]
  %s2 = sld [smem:[#allocation0]]
  $region48: #{tpu_custom_call.1} parent=0
    _
  %s4 = ssub.s32 1, %s2
  %s5 = scalar_select 0, %s4, %s2
  $region1: #{tpu_custom_call.1} parent=0
    #allocation2 [shape = 'u8[65536]{0}', space=vmem, size = 0x10000, scoped, tag = 'input window, operand 0']
    #allocation3 [shape = 's32[2]{0}', space=sflag, size = 0x8, scoped, tag = 'scoped memory for tpu_custom_call.1']
    #allocation4 [shape = 's32[2]{0}', space=sflag, size = 0x8, scoped, tag = 'scoped memory for tpu_custom_call.1']
    #allocation5 [shape = 'u8[16384]{0}', space=vmem, size = 0x4000, scoped, tag = 'output window, operand 0']
    %6 = vsyncpa [#allocation3], 0
    %s7 = scalar_lea.sflag [#allocation3], 1
    %8 = vsyncpa %s7, 0
    %9 = vsyncpa [#allocation4], 0
    %s10 = scalar_lea.sflag [#allocation4], 1
    %11 = vsyncpa %s10, 0
    loop: start=0, step=1, limit=4
    $region2: #{tpu_custom_call.1} parent=1 // loop_pre_header
      _
    $region3: #{tpu_custom_call.1} parent=1 // loop_header
      %s13 = sphi 0, %s17
      %p14 = scmp.ge.s32.totalorder %s13, 4
      %s20 = sphi 0, %s32
      %s21 = sphi 0, %s28
      %s22 = sphi 0, %s20
      %s23 = sphi 0, %s21
      %s24 = sphi 0, %s22
      %s25 = sphi 0, %s23
      %s37 = sphi 0, %s39
      %s40 = sphi 0, %s37
      %s41 = sphi 0, %s40
      %s57 = sphi 0, %s41
      %s65 = sphi 0, %s67
      %s68 = sphi 0, %s65
      %s69 = sphi 0, %s68
      %s85 = sphi 0, %s69
    $region4: #{tpu_custom_call.1} parent=1 // loop_header_branch
      %16 = sbr.rel (%p14) target = $region8
    $region5: #{tpu_custom_call.1} parent=1 // loop_body
      %s18 = ssub.s32 %s13, 1
      %s19 = ssub.s32 %s13, 2
      %s26 = sadd.s32 1, %s21
      %p27 = scmp.ge.s32.totalorder %s26, 1
      %s28 = scalar_select %p27, 0, %s26
      %s29 = sadd.s32 1, %s20
      %s30 = scalar_select %p27, %s29, %s20
      %p31 = scmp.ge.s32.totalorder %s30, 2
      %s32 = scalar_select %p31, 0, %s30
      %s33 = ssub.s32 %s20, %s32
      %s34 = ssub.s32 %s21, %s28
      %s35 = sor.u32 %s33, %s34
      %p36 = scmp.eq.s32.totalorder %s35, 0
      %s38 = sadd.s32 %s37, 1
      %s39 = scalar_select %p36, %s37, %s38
      %p42 = pneg %p36
      %p43 = scmp.eq.s32.totalorder %s13, 1
      %p44 = por %p42, %p43
      %p45 = scmp.ne.s32.totalorder %s37, %s40
      %p46 = scmp.eq.s32.totalorder %s13, 0
      %p47 = por %p45, %p46
      %p48 = scmp.ne.s32.totalorder %s37, %s40
      %p49 = scmp.eq.s32.totalorder %s18, 1
      %p50 = por %p48, %p49
      %p51 = scmp.ne.s32.totalorder %s40, %s41
      %p52 = scmp.eq.s32.totalorder %s18, 0
      %p53 = por %p51, %p52
      %p54 = scmp.ne.s32.totalorder %s40, %s41
      %p55 = scmp.eq.s32.totalorder %s19, 1
      %p56 = por %p54, %p55
      %p58 = scmp.ne.s32.totalorder %s41, %s57
      %p59 = scmp.eq.s32.totalorder %s19, 0
      %p60 = por %p58, %p59
      %s61 = ssub.s32 %s20, %s32
      %s62 = ssub.s32 %s21, %s28
      %s63 = sor.u32 %s61, %s62
      %p64 = scmp.eq.s32.totalorder %s63, 0
      %s66 = sadd.s32 %s65, 1
      %s67 = scalar_select %p64, %s65, %s66
      %p70 = pneg %p64
      %p71 = scmp.eq.s32.totalorder %s13, 1
      %p72 = por %p70, %p71
      %p73 = scmp.ne.s32.totalorder %s65, %s68
      %p74 = scmp.eq.s32.totalorder %s13, 0
      %p75 = por %p73, %p74
      %p76 = scmp.ne.s32.totalorder %s65, %s68
      %p77 = scmp.eq.s32.totalorder %s18, 1
      %p78 = por %p76, %p77
      %p79 = scmp.ne.s32.totalorder %s68, %s69
      %p80 = scmp.eq.s32.totalorder %s18, 0
      %p81 = por %p79, %p80
      %p82 = scmp.ne.s32.totalorder %s68, %s69
      %p83 = scmp.eq.s32.totalorder %s19, 1
      %p84 = por %p82, %p83
      %p86 = scmp.ne.s32.totalorder %s69, %s85
      %p87 = scmp.eq.s32.totalorder %s19, 0
      %p88 = por %p86, %p87
      %p89 = scmp.le.s32.totalorder 1, %s13
      %p90 = scmp.lt.s32.totalorder %s13, 3
      %p91 = pnand %p89, %p90
      %p92 = pneg %p91
      // Predicated region
      $region9: #{tpu_custom_call.1} parent=5 // pred_check
        _
      $region10: #{tpu_custom_call.1} parent=5 // pred_check_branch
        %94 = sbr.rel (%p91) target = $region12
      $region11: #{tpu_custom_call.1} parent=5 // pred_region
        %s95 = ssub.s32 %s13, 1
      $region12: #{tpu_custom_call.1} parent=5 // pred_fallthru
        _
      %p96 = scmp.lt.s32.totalorder %s13, 2
      // Predicated region
      $region13: #{tpu_custom_call.1} parent=5 // pred_check
        %p97 = pneg %p96
      $region14: #{tpu_custom_call.1} parent=5 // pred_check_branch
        %99 = sbr.rel (%p97) target = $region16
      $region15: #{tpu_custom_call.1} parent=5 // pred_region
        // Predicated region
        $region17: #{tpu_custom_call.1} parent=15 // pred_check
          %p100 = pneg %p47
        $region18: #{tpu_custom_call.1} parent=15 // pred_check_branch
          %102 = sbr.rel (%p100) target = $region20
        $region19: #{tpu_custom_call.1} parent=15 // pred_region
          %s103 = sand.u32 %s37, 1
          %s104 = scalar_lea.sflag [#allocation3], %s103
          %s105 = sand.u32 %s37, 1
          %s106 = smul.addr %s105, 64
          %s107 = scalar_lea.vmem [#allocation2], %s106
          %s108 = smul.u32 2, %s21
          %s110 = ssub.s32 1024, 1024
          %111 = vsyncadd %s104, %s110
          %s112 = smul.addr %s20, 8
          %s113 = sadd.s32 %s108, %s112
          %s114 = smul.addr %s113, 128
          %s115 = scalar_lea.hbm %s0, %s114
          %s116 = sshll.u32 %s107, 4
          %s117 = int_to_ptr.vmem [resolvable:$true] %s116
          %122 = dma.hbm_to_vmem [thread:$0]  %s115, 1024, %s117, %s104, 128, 128, 8
        $region20: #{tpu_custom_call.1} parent=15 // pred_fallthru
          _
      $region16: #{tpu_custom_call.1} parent=5 // pred_fallthru
        _
      %p123 = scmp.le.s32.totalorder 1, %s13
      %p124 = scmp.lt.s32.totalorder %s13, 3
      %p125 = pnand %p123, %p124
      %p126 = pneg %p125
      // Predicated region
      $region21: #{tpu_custom_call.1} parent=5 // pred_check
        _
      $region22: #{tpu_custom_call.1} parent=5 // pred_check_branch
        %128 = sbr.rel (%p125) target = $region24
      $region23: #{tpu_custom_call.1} parent=5 // pred_region
        %s129 = ssub.s32 %s13, 1
        %s130 = sand.u32 %s40, 1
        %s131 = scalar_lea.sflag [#allocation3], %s130
        %s132 = sand.u32 %s40, 1
        %s133 = smul.addr %s132, 64
        %s134 = scalar_lea.vmem [#allocation2], %s133
        // Predicated region
        $region25: #{tpu_custom_call.1} parent=23 // pred_check
          %p135 = pneg %p53
        $region26: #{tpu_custom_call.1} parent=23 // pred_check_branch
          %137 = sbr.rel (%p135) target = $region28
        $region27: #{tpu_custom_call.1} parent=23 // pred_region
          %138 = dma.done %s131, 1024
        $region28: #{tpu_custom_call.1} parent=23 // pred_fallthru
          _
        %s139 = sand.u32 %s40, 1
        %s140 = scalar_lea.sflag [#allocation3], %s139
        %s141 = sand.u32 %s40, 1
        %s142 = smul.addr %s141, 64
        %s143 = scalar_lea.vmem [#allocation2], %s142
        %p144 = pneg %p53
        %p145 = pneg %p50
        %p146 = pneg %p81
        %p147 = pneg %p78
        %s148 = sand.u32 %s68, 1
        %s149 = scalar_lea.sflag [#allocation4], %s148
        %s150 = sand.u32 %s68, 1
        %s151 = smul.addr %s150, 16
        %s152 = scalar_lea.vmem [#allocation5], %s151
        %s153 = smul.u32 2, %s23
        %s154 = smul.u32 2, %s23
        loop: start=0, step=1, limit=4
        $region29: #{tpu_custom_call.1} parent=23 // loop_pre_header
          _
        $region30: #{tpu_custom_call.1} parent=23 // loop_header
          %s156 = sphi 0, %s160
          %p157 = scmp.ge.s32.totalorder %s156, 4
          %v161 = vphi 0.0, %v171
          %v162 = vphi 0.0, %v172
        $region31: #{tpu_custom_call.1} parent=23 // loop_header_branch
          %159 = sbr.rel (%p157) target = $region35
        $region32: #{tpu_custom_call.1} parent=23 // loop_body
          %s163 = scvt.s32.f32 %s156
          %s164 = smul.u32 %s156, 16
          %s165 = scalar_lea.vmem %s134, %s164 [#allocation2]
          %v166 = vld [vmem:[%s165] sm:$0xff]
          %v167 = vld [vmem:[%s165 + $0x8] sm:$0xff]
          %v168 = vstv %s163
          %v169 = vmul.f32 %v166, %v168
          %v170 = vmul.f32 %v167, %v168
          %v171 = vadd.f32 %v161, %v169
          %v172 = vadd.f32 %v162, %v170
        $region33: #{tpu_custom_call.1} parent=23 // loop_footer
          %s160 = sadd.s32 1, %s156
        $region34: #{tpu_custom_call.1} parent=23 // loop_footer_branch
          %155 = sbr.rel target = $region30
        $region35: #{tpu_custom_call.1} parent=23 // loop_exit
          _
        %vm173 = vcmask 130048
        %174 = vst.msk [vmem:[%s152] sm:$0xff] %vm173, %v161
        %175 = vst.msk [vmem:[%s152 + $0x8] sm:$0xff] %vm173, %v162
        %s176 = sand.u32 %s68, 1
        %s177 = scalar_lea.sflag [#allocation4], %s176
        %s178 = sand.u32 %s68, 1
        %s179 = smul.addr %s178, 16
        %s180 = scalar_lea.vmem [#allocation5], %s179
        // Predicated region
        $region36: #{tpu_custom_call.1} parent=23 // pred_check
          %p181 = pneg %p78
        $region37: #{tpu_custom_call.1} parent=23 // pred_check_branch
          %183 = sbr.rel (%p181) target = $region39
        $region38: #{tpu_custom_call.1} parent=23 // pred_region
          %s184 = smul.u32 2, %s23
          %s186 = ssub.s32 256, 256
          %187 = vsyncadd %s177, %s186
          %s188 = smul.addr %s22, 2
          %s189 = sadd.s32 %s184, %s188
          %s190 = smul.addr %s189, 128
          %s191 = scalar_lea.hbm %s1, %s190
          %s192 = sshll.u32 %s180, 4
          %s193 = int_to_ptr.vmem [resolvable:$true] %s192
          %198 = dma.vmem_to_hbm [thread:$0]  %s193, 256, %s191, %s177, 128, 128, 8
        $region39: #{tpu_custom_call.1} parent=23 // pred_fallthru
          _
      $region24: #{tpu_custom_call.1} parent=5 // pred_fallthru
        _
      %p199 = scmp.le.s32.totalorder 2, %s13
      // Predicated region
      $region40: #{tpu_custom_call.1} parent=5 // pred_check
        %p200 = pneg %p199
      $region41: #{tpu_custom_call.1} parent=5 // pred_check_branch
        %202 = sbr.rel (%p200) target = $region43
      $region42: #{tpu_custom_call.1} parent=5 // pred_region
        %s203 = ssub.s32 %s13, 2
        // Predicated region
        $region44: #{tpu_custom_call.1} parent=42 // pred_check
          %p204 = pneg %p84
        $region45: #{tpu_custom_call.1} parent=42 // pred_check_branch
          %206 = sbr.rel (%p204) target = $region47
        $region46: #{tpu_custom_call.1} parent=42 // pred_region
          %s207 = sand.u32 %s69, 1
          %s208 = scalar_lea.sflag [#allocation4], %s207
          %s209 = sand.u32 %s69, 1
          %s210 = smul.addr %s209, 16
          %s211 = scalar_lea.vmem [#allocation5], %s210
          %212 = dma.done %s208, 256
        $region47: #{tpu_custom_call.1} parent=42 // pred_fallthru
          _
      $region43: #{tpu_custom_call.1} parent=5 // pred_fallthru
        _
    $region6: #{tpu_custom_call.1} parent=1 // loop_footer
      %s17 = sadd.s32 1, %s13
    $region7: #{tpu_custom_call.1} parent=1 // loop_footer_branch
      %12 = sbr.rel target = $region3
    $region8: #{tpu_custom_call.1} parent=1 // loop_exit
      _
    %213 = vsyncpa [#allocation3], 1
    %s214 = scalar_lea.sflag [#allocation3], 1
    %215 = vsyncpa %s214, 1
    %216 = vsyncpa [#allocation4], 1
    %s217 = scalar_lea.sflag [#allocation4], 1
    %218 = vsyncpa %s217, 1

</llo_original>
